<compile_context>
chip_gen: v7x
topology: tpu7x:2x2x1
jax: 0.10.0
libtpu: 0.0.40
codegen_flags: <defaults>
</compile_context>

<pallas_src>
import functools

import jax
import jax.numpy as jnp
from jax.experimental import pallas as pl
from jax.experimental.pallas import tpu as pltpu

_COMPUTE_DTYPE = jnp.bfloat16          # MXU-native on v5e / v6e / v7x
_VMEM_CLAMP = 56 * 1024 * 1024         # stay under v7x's 64 MiB physical VMEM


def _vmem_limit(nbytes):
    """Per-call VMEM budget: actual need + headroom, clamped v7x-safe."""
    return int(min(max(nbytes + (4 << 20), 16 << 20), _VMEM_CLAMP))


def _reduction_tile(dim, target):
    """Reduction (k) tile MUST divide Din: otherwise the padded last k block
    accumulates undefined columns into valid outputs. Prefer 128-aligned
    divisors; fall back to the full dim (always legal and correct)."""
    t = min(target, dim)
    if t == dim:
        return dim
    for cand in range(t - (t % 128), 0, -128):
        if dim % cand == 0:
            return cand
    return dim


# ---------------------------------------------------------------------------
# Kernel 1/2: tiled dense layer  y = x @ W + b   (used for qkv and for proj)
# ---------------------------------------------------------------------------
def _linear_kernel(x_ref, w_ref, b_ref, o_ref, acc_ref):
    # Reduction (k) axis is the innermost grid axis; the output block is
    # revisited across it, so init / finalize with pl.when.
    @pl.when(pl.program_id(2) == 0)
    def _():
        acc_ref[...] = jnp.zeros_like(acc_ref)

    acc_ref[...] += jnp.dot(
        x_ref[...], w_ref[...], preferred_element_type=jnp.float32
    )

    @pl.when(pl.program_id(2) == pl.num_programs(2) - 1)
    def _():
        o_ref[...] = (acc_ref[...] + b_ref[...]).astype(o_ref.dtype)


def linear(x2d, w, b, *, out_dtype=None, tm=512, tn=512, tk=512):
    """x2d: (M, Din), w: (Din, Dout), b: (Dout,) -> (M, Dout) in out_dtype.

    Operands are cast to bf16 (full MXU rate on every TPU generation, half the
    DMA bytes per tile); accumulation stays f32; bias is added in f32.
    M / Dout axes are "parallel" (shardable across TensorCores), the reduction
    tile is forced to divide Din, and M / Dout padding is safe (padded rows /
    cols only feed output elements that are dropped at writeback).
    """
    M, Din = x2d.shape
    Dout = w.shape[1]
    out_dtype = out_dtype if out_dtype is not None else x2d.dtype

    x2d = x2d.astype(_COMPUTE_DTYPE)
    w = w.astype(_COMPUTE_DTYPE)
    b = b.astype(jnp.float32).reshape(1, Dout)

    tm = min(tm, M)
    tn = min(tn, Dout)
    tk = _reduction_tile(Din, tk)
    grid = (pl.cdiv(M, tm), pl.cdiv(Dout, tn), Din // tk)

    itm_in = jnp.dtype(_COMPUTE_DTYPE).itemsize
    vmem_bytes = (
        2 * (tm * tk + tk * tn) * itm_in          # double-buffered x / w tiles
        + 2 * tn * 4                              # bias
        + tm * tn * 4                             # f32 accumulator
        + 2 * tm * tn * jnp.dtype(out_dtype).itemsize  # double-buffered output
    )

    return pl.pallas_call(
        _linear_kernel,
        out_shape=jax.ShapeDtypeStruct((M, Dout), out_dtype),
        grid_spec=pltpu.PrefetchScalarGridSpec(
            num_scalar_prefetch=0,
            grid=grid,
            in_specs=[
                pl.BlockSpec((tm, tk), lambda i, j, k: (i, k)),
                pl.BlockSpec((tk, tn), lambda i, j, k: (k, j)),
                pl.BlockSpec((1, tn), lambda i, j, k: (0, j)),
            ],
            out_specs=pl.BlockSpec((tm, tn), lambda i, j, k: (i, j)),
            scratch_shapes=[pltpu.VMEM((tm, tn), jnp.float32)],
        ),
        compiler_params=pltpu.CompilerParams(
            dimension_semantics=("parallel", "parallel", "arbitrary"),
            vmem_limit_bytes=_vmem_limit(vmem_bytes),
        ),
    )(x2d, w, b)


# ---------------------------------------------------------------------------
# Kernel 2/2: multi-head attention, one batch element per grid step.
# Reads the fused (B, N, 3D) bf16 qkv buffer directly (head split via static
# column slices inside the kernel -> no HBM transposes around the kernel) and
# writes a lane-dense (B, N, D) output one 128-lane-aligned head group at a
# time (bounds live ranges to a single head pair; no full-width concatenate).
# ---------------------------------------------------------------------------
def _attn_kernel(qkv_ref, o_ref, *, n_heads, scale):
    _, n_tok, three_d = qkv_ref.shape
    d = three_d // 3
    hd = d // n_heads

    # Group heads so every qkv column slice and output store is 128-lane
    # aligned when head_dim < 128 (e.g. hd=64 -> pairs of heads, width 128).
    if hd % 128 == 0:
        group = 1
    elif 128 % hd == 0 and n_heads % (128 // hd) == 0:
        group = 128 // hd
    else:
        group = 1

    for g in range(n_heads // group):       # static loop
        lo = g * group * hd
        width = group * hd
        q_blk = qkv_ref[0, :, lo:lo + width]                        # (N, width)
        k_blk = qkv_ref[0, :, d + lo:d + lo + width]
        v_blk = qkv_ref[0, :, 2 * d + lo:2 * d + lo + width]

        head_outs = []
        for hh in range(group):
            c0 = hh * hd
            # Fold scale into q in f32 (cheap: N*hd), then feed bf16 to the MXU.
            q = (q_blk[:, c0:c0 + hd].astype(jnp.float32) * scale).astype(
                _COMPUTE_DTYPE
            )
            k = k_blk[:, c0:c0 + hd].astype(_COMPUTE_DTYPE)
            v = v_blk[:, c0:c0 + hd].astype(_COMPUTE_DTYPE)

            # q @ k^T without an explicit transpose (contract the hd axes).
            s = jax.lax.dot_general(
                q, k, (((1,), (1,)), ((), ())),
                preferred_element_type=jnp.float32,
            )                                                      # (N, N) f32
            s = s - jnp.max(s, axis=-1, keepdims=True)
            p = jnp.exp(s)                                         # f32 softmax numerics
            denom = jnp.sum(p, axis=-1, keepdims=True)             # (N, 1)

            # Un-normalized PV matmul in bf16, then normalize AFTER the matmul:
            # N*hd multiplies instead of N*N on the VPU.
            o_h = jnp.dot(
                p.astype(_COMPUTE_DTYPE), v, preferred_element_type=jnp.float32
            )                                                      # (N, hd) f32
            o_h = o_h * pl.reciprocal(denom)                       # exact reciprocal
            head_outs.append(o_h.astype(o_ref.dtype))

        block = head_outs[0] if group == 1 else jnp.concatenate(head_outs, -1)
        o_ref[0, :, lo:lo + width] = block                         # 128-aligned store


def mha_attention(qkv, n_heads, scale, out_dtype):
    """qkv: (B, N, 3D) fused projection -> (B, N, D) attention output."""
    B, N, three_d = qkv.shape
    D = three_d // 3

    itm_in = jnp.dtype(qkv.dtype).itemsize
    itm_out = jnp.dtype(out_dtype).itemsize
    vmem_bytes = (
        2 * N * three_d * itm_in       # double-buffered qkv block
        + 2 * N * D * itm_out          # double-buffered output block
        + 3 * N * N * 4                # per-head score / exp temporaries (f32)
        + 4 * N * 128 * 4              # per-group q/k/v/out working tiles
    )

    return pl.pallas_call(
        functools.partial(_attn_kernel, n_heads=n_heads, scale=scale),
        out_shape=jax.ShapeDtypeStruct((B, N, D), out_dtype),
        grid_spec=pltpu.PrefetchScalarGridSpec(
            num_scalar_prefetch=0,
            grid=(B,),
            in_specs=[pl.BlockSpec((1, N, three_d), lambda b: (b, 0, 0))],
            out_specs=pl.BlockSpec((1, N, D), lambda b: (b, 0, 0)),
        ),
        compiler_params=pltpu.CompilerParams(
            dimension_semantics=("parallel",),
            vmem_limit_bytes=_vmem_limit(vmem_bytes),
        ),
    )(qkv)


# ---------------------------------------------------------------------------
# Full forward pass (no wrapper-side transposes; reshapes only split/merge
# leading dims). Intermediate activations stay in bf16; only the final proj
# output returns to the module dtype.
# ---------------------------------------------------------------------------
def attention_forward(x, params, n_heads):
    B, N, D = x.shape
    head_dim = D // n_heads
    scale = head_dim ** (-0.5)

    # fused qkv projection: (B*N, D) @ (D, 3D) + b -> (B, N, 3D) bf16
    qkv = linear(
        x.reshape(B * N, D), params["w_qkv"], params["b_qkv"],
        out_dtype=_COMPUTE_DTYPE,
    )
    qkv = qkv.reshape(B, N, 3 * D)

    # multi-head attention straight off the fused buffer -> (B, N, D) bf16
    weighted = mha_attention(qkv, n_heads, scale, _COMPUTE_DTYPE)

    # output projection, back to the module dtype
    out = linear(
        weighted.reshape(B * N, D), params["w_proj"], params["b_proj"],
        out_dtype=x.dtype,
    )
    return out.reshape(B, N, D)


# ---------------------------------------------------------------------------
# Pure-JAX f32 reference (mirrors the PyTorch module exactly)
# ---------------------------------------------------------------------------
def attention_reference(x, params, n_heads):
    B, N, D = x.shape
    hd = D // n_heads
    scale = hd ** (-0.5)
    qkv = x @ params["w_qkv"] + params["b_qkv"]
    qkv = qkv.reshape(B, N, 3, n_heads, hd).transpose(2, 0, 3, 1, 4)
    q, k, v = qkv[0], qkv[1], qkv[2]
    dp = jnp.einsum("bhqd,bhkd->bhqk", q, k) * scale
    attn = jax.nn.softmax(dp, axis=-1)
    wa = jnp.einsum("bhqk,bhkd->bhqd", attn, v)
    wa = wa.transpose(0, 2, 1, 3).reshape(B, N, D)
    return wa @ params["w_proj"] + params["b_proj"]


if __name__ == "__main__":
    # Small but lane-aligned shapes: D multiple of 128 keeps every block
    # lane-dense; head_dim = 64 matches typical ViT heads (heads paired -> 128).
    B, N, D, H = 2, 8, 256, 4   # batch, tokens, dim, heads  (head_dim = 64)

    key = jax.random.PRNGKey(0)
    kx, k1, k2, k3, k4 = jax.random.split(key, 5)

    x = jax.random.normal(kx, (B, N, D), dtype=jnp.float32)
    params = {
        "w_qkv": jax.random.normal(k1, (D, 3 * D), dtype=jnp.float32) * 0.05,
        "b_qkv": jax.random.normal(k2, (3 * D,), dtype=jnp.float32) * 0.05,
        "w_proj": jax.random.normal(k3, (D, D), dtype=jnp.float32) * 0.05,
        "b_proj": jax.random.normal(k4, (D,), dtype=jnp.float32) * 0.05,
    }

    out = attention_forward(x, params, n_heads=H)
    out = jax.block_until_ready(out)

    ref = attention_reference(x, params, n_heads=H)
    assert out.shape == (B, N, D)
    # Tolerance accounts for bf16 MXU operands / bf16 intermediate activations
    # (reference is pure f32).
    assert jnp.allclose(out, ref, atol=5e-2, rtol=5e-2), "mismatch vs reference"

    print("KERNEL_OK")
</pallas_src>

<mosaic_0001>
module attributes {stable_mosaic.version = 11 : i64} {
  func.func @_linear_kernel(%arg0: i32, %arg1: i32, %arg2: i32, %arg3: memref<16x256xbf16, #tpu.memory_space<vmem>>, %arg4: memref<256x512xbf16, #tpu.memory_space<vmem>>, %arg5: memref<1x512xf32, #tpu.memory_space<vmem>>, %arg6: memref<16x512xbf16, #tpu.memory_space<vmem>>, %arg7: memref<16x512xf32, #tpu.memory_space<vmem>>) attributes {dimension_semantics = [#tpu.dimension_semantics<parallel>, #tpu.dimension_semantics<parallel>, #tpu.dimension_semantics<arbitrary>], iteration_bounds = array<i64: 1, 2, 1>, scalar_prefetch = 0 : i64, scratch_operands = 1 : i64, tpu.core_type = #tpu.core_type<tc>, window_params = [{transform_indices = @transform_0, window_bounds = array<i64: 16, 256>}, {transform_indices = @transform_1, window_bounds = array<i64: 256, 512>}, {transform_indices = @transform_2, window_bounds = array<i64: 1, 512>}, {transform_indices = @transform_3, window_bounds = array<i64: 16, 512>}]} {
    %c0_i32 = arith.constant 0 : i32
    %0 = arith.cmpi eq, %arg2, %c0_i32 : i32
    %1 = arith.extui %0 : i1 to i32
    %c0_i32_0 = arith.constant 0 : i32
    %2 = arith.cmpi ne, %1, %c0_i32_0 : i32
    scf.if %2 {
      %cst_10 = arith.constant 0.000000e+00 : f32
      %12 = vector.broadcast %cst_10 : f32 to vector<16x512xf32>
      %c0_11 = arith.constant 0 : index
      %c0_12 = arith.constant 0 : index
      %13 = vector.load %arg7[%c0_11, %c0_12] : memref<16x512xf32, #tpu.memory_space<vmem>>, vector<16x512xf32>
      tpu.vector_store %arg7[%c0_11, %c0_12], %12 {strides = array<i32>} : memref<16x512xf32, #tpu.memory_space<vmem>>, vector<16x512xf32>,
    } else {
    }
    %c0 = arith.constant 0 : index
    %c0_1 = arith.constant 0 : index
    %3 = vector.load %arg7[%c0, %c0_1] : memref<16x512xf32, #tpu.memory_space<vmem>>, vector<16x512xf32>
    %c0_2 = arith.constant 0 : index
    %c0_3 = arith.constant 0 : index
    %4 = vector.load %arg3[%c0_2, %c0_3] : memref<16x256xbf16, #tpu.memory_space<vmem>>, vector<16x256xbf16>
    %c0_4 = arith.constant 0 : index
    %c0_5 = arith.constant 0 : index
    %5 = vector.load %arg4[%c0_4, %c0_5] : memref<256x512xbf16, #tpu.memory_space<vmem>>, vector<256x512xbf16>
    %cst = arith.constant dense<0.000000e+00> : vector<16x512xf32>
    %6 = tpu.matmul %4, %5, %cst {dimension_numbers = #tpu.dot_dimension_numbers<[1], [0], [0], [1], [0, 0, 1, 1], [], []>} : vector<16x256xbf16>, vector<256x512xbf16>, vector<16x512xf32> -> vector<16x512xf32>
    %7 = arith.addf %3, %6 : vector<16x512xf32>
    %c0_6 = arith.constant 0 : index
    %c0_7 = arith.constant 0 : index
    %8 = vector.load %arg7[%c0_6, %c0_7] : memref<16x512xf32, #tpu.memory_space<vmem>>, vector<16x512xf32>
    tpu.vector_store %arg7[%c0_6, %c0_7], %7 {strides = array<i32>} : memref<16x512xf32, #tpu.memory_space<vmem>>, vector<16x512xf32>,
    %c0_i32_8 = arith.constant 0 : i32
    %9 = arith.cmpi eq, %arg2, %c0_i32_8 : i32
    %10 = arith.extui %9 : i1 to i32
    %c0_i32_9 = arith.constant 0 : i32
    %11 = arith.cmpi ne, %10, %c0_i32_9 : i32
    scf.if %11 {
      %c0_10 = arith.constant 0 : index
      %c0_11 = arith.constant 0 : index
      %12 = vector.load %arg7[%c0_10, %c0_11] : memref<16x512xf32, #tpu.memory_space<vmem>>, vector<16x512xf32>
      %c0_12 = arith.constant 0 : index
      %c0_13 = arith.constant 0 : index
      %13 = vector.load %arg5[%c0_12, %c0_13] : memref<1x512xf32, #tpu.memory_space<vmem>>, vector<1x512xf32>
      %14 = vector.broadcast %13 : vector<1x512xf32> to vector<16x512xf32>
      %15 = arith.addf %12, %14 : vector<16x512xf32>
      %16 = arith.truncf %15 : vector<16x512xf32> to vector<16x512xbf16>
      %c0_14 = arith.constant 0 : index
      %c0_15 = arith.constant 0 : index
      %17 = vector.load %arg6[%c0_14, %c0_15] : memref<16x512xbf16, #tpu.memory_space<vmem>>, vector<16x512xbf16>
      tpu.vector_store %arg6[%c0_14, %c0_15], %16 {strides = array<i32>} : memref<16x512xbf16, #tpu.memory_space<vmem>>, vector<16x512xbf16>,
    } else {
    }
    return
  }
  func.func @transform_0(%arg0: i32, %arg1: i32, %arg2: i32) -> (i32, i32) {
    %c0_i32 = arith.constant 0 : i32
    return %arg0, %arg2 : i32, i32
  }
  func.func @transform_1(%arg0: i32, %arg1: i32, %arg2: i32) -> (i32, i32) {
    %c0_i32 = arith.constant 0 : i32
    return %arg2, %arg1 : i32, i32
  }
  func.func @transform_2(%arg0: i32, %arg1: i32, %arg2: i32) -> (i32, i32) {
    %c0_i32 = arith.constant 0 : i32
    %c0_i32_0 = arith.constant 0 : i32
    return %c0_i32, %arg1 : i32, i32
  }
  func.func @transform_3(%arg0: i32, %arg1: i32, %arg2: i32) -> (i32, i32) {
    %c0_i32 = arith.constant 0 : i32
    return %arg0, %arg1 : i32, i32
  }
}

</mosaic_0001>

<llo_original>
// kernel: tpu_custom_call.1
$region0: #{tpu_custom_call.1}
  #allocation0 [shape = 'u32[]', space=smem, size = 0x4, offset = 0x4, fixed_abs, tag = 'smem constant byte address 0x4 - core index']
  #allocation1 [shape = 'u32[144,128]{1,0:T(1,128)}', space=vmem, size = 0x12000, scoped, tag = 'internal scratch']
  #allocation2 [shape = 'f32[16,512]{1,0:T(8,128)}', space=vmem, size = 0x8000, scoped, tag = 'scratch operand']
  %s0 = inlined_call_operand.hbm [shape: bf16[16,256], index: 0, kind: input, shape index: {}]
  %s1 = inlined_call_operand.hbm [shape: bf16[256,768], index: 1, kind: input, shape index: {}]
  %s2 = inlined_call_operand.vmem [shape: f32[1,768], index: 2, kind: input, shape index: {}]
  %s3 = inlined_call_operand.hbm [shape: bf16[16,768], index: 3, kind: output, shape index: {}]
  %s4 = sld [smem:[#allocation0]]
  $region61: #{tpu_custom_call.1} parent=0
    _
  %s6 = ssub.s32 1, %s4
  %s7 = scalar_select 0, %s6, %s4
  $region1: #{tpu_custom_call.1} parent=0
    #allocation3 [shape = 'u8[8192]{0}', space=vmem, size = 0x2000, scoped, tag = 'input window, operand 0, single buffered']
    #allocation4 [shape = 's32[2]{0}', space=sflag, size = 0x8, scoped, tag = 'scoped memory for tpu_custom_call.1']
    #allocation5 [shape = 's32[2]{0}', space=sflag, size = 0x8, scoped, tag = 'scoped memory for tpu_custom_call.1']
    #allocation6 [shape = 'u8[524288]{0}', space=vmem, size = 0x80000, scoped, tag = 'input window, operand 1']
    #allocation7 [shape = 's32[2]{0}', space=sflag, size = 0x8, scoped, tag = 'scoped memory for tpu_custom_call.1']
    #allocation8 [shape = 'u8[32768]{0}', space=vmem, size = 0x8000, scoped, tag = 'output window, operand 0']
    %8 = vsyncpa [#allocation4], 0
    %9 = vsyncpa [#allocation7], 0
    %s10 = scalar_lea.sflag [#allocation7], 1
    %11 = vsyncpa %s10, 0
    %12 = vsyncpa [#allocation5], 0
    %s13 = scalar_lea.sflag [#allocation5], 1
    %14 = vsyncpa %s13, 0
    loop: start=0, step=1, limit=4
    $region2: #{tpu_custom_call.1} parent=1 // loop_pre_header
      _
    $region3: #{tpu_custom_call.1} parent=1 // loop_header
      %s16 = sphi 0, %s20
      %p17 = scmp.ge.s32.totalorder %s16, 4
      %s23 = sphi 0, %s42
      %s24 = sphi 0, %s38
      %s25 = sphi 0, %s34
      %s26 = sphi 0, %s23
      %s27 = sphi 0, %s24
      %s28 = sphi 0, %s25
      %s29 = sphi 0, %s26
      %s30 = sphi 0, %s27
      %s31 = sphi 0, %s28
      %s47 = sphi 0, %s49
      %s50 = sphi 0, %s47
      %s51 = sphi 0, %s50
      %s67 = sphi 0, %s51
      %s75 = sphi 0, %s77
      %s78 = sphi 0, %s75
      %s79 = sphi 0, %s78
      %s95 = sphi 0, %s79
      %s101 = sphi 0, %s103
      %s104 = sphi 0, %s101
      %s105 = sphi 0, %s104
      %s121 = sphi 0, %s105
      %s129 = sphi 0, %s131
      %s132 = sphi 0, %s129
      %s133 = sphi 0, %s132
      %s149 = sphi 0, %s133
    $region4: #{tpu_custom_call.1} parent=1 // loop_header_branch
      %19 = sbr.rel (%p17) target = $region8
    $region5: #{tpu_custom_call.1} parent=1 // loop_body
      %s21 = ssub.s32 %s16, 1
      %s22 = ssub.s32 %s16, 2
      %s32 = sadd.s32 1, %s25
      %p33 = scmp.ge.s32.totalorder %s32, 1
      %s34 = scalar_select %p33, 0, %s32
      %s35 = sadd.s32 1, %s24
      %s36 = scalar_select %p33, %s35, %s24
      %p37 = scmp.ge.s32.totalorder %s36, 2
      %s38 = scalar_select %p37, 0, %s36
      %s39 = sadd.s32 1, %s23
      %s40 = scalar_select %p37, %s39, %s23
      %p41 = scmp.ge.s32.totalorder %s40, 1
      %s42 = scalar_select %p41, 0, %s40
      %s43 = ssub.s32 %s23, %s42
      %s44 = ssub.s32 %s25, %s34
      %s45 = sor.u32 %s43, %s44
      %p46 = scmp.eq.s32.totalorder %s45, 0
      %s48 = sadd.s32 %s47, 1
      %s49 = scalar_select %p46, %s47, %s48
      %p52 = pneg %p46
      %p53 = scmp.eq.s32.totalorder %s16, 1
      %p54 = por %p52, %p53
      %p55 = scmp.ne.s32.totalorder %s47, %s50
      %p56 = scmp.eq.s32.totalorder %s16, 0
      %p57 = por %p55, %p56
      %p58 = scmp.ne.s32.totalorder %s47, %s50
      %p59 = scmp.eq.s32.totalorder %s21, 1
      %p60 = por %p58, %p59
      %p61 = scmp.ne.s32.totalorder %s50, %s51
      %p62 = scmp.eq.s32.totalorder %s21, 0
      %p63 = por %p61, %p62
      %p64 = scmp.ne.s32.totalorder %s50, %s51
      %p65 = scmp.eq.s32.totalorder %s22, 1
      %p66 = por %p64, %p65
      %p68 = scmp.ne.s32.totalorder %s51, %s67
      %p69 = scmp.eq.s32.totalorder %s22, 0
      %p70 = por %p68, %p69
      %s71 = ssub.s32 %s25, %s34
      %s72 = ssub.s32 %s24, %s38
      %s73 = sor.u32 %s71, %s72
      %p74 = scmp.eq.s32.totalorder %s73, 0
      %s76 = sadd.s32 %s75, 1
      %s77 = scalar_select %p74, %s75, %s76
      %p80 = pneg %p74
      %p81 = scmp.eq.s32.totalorder %s16, 1
      %p82 = por %p80, %p81
      %p83 = scmp.ne.s32.totalorder %s75, %s78
      %p84 = scmp.eq.s32.totalorder %s16, 0
      %p85 = por %p83, %p84
      %p86 = scmp.ne.s32.totalorder %s75, %s78
      %p87 = scmp.eq.s32.totalorder %s21, 1
      %p88 = por %p86, %p87
      %p89 = scmp.ne.s32.totalorder %s78, %s79
      %p90 = scmp.eq.s32.totalorder %s21, 0
      %p91 = por %p89, %p90
      %p92 = scmp.ne.s32.totalorder %s78, %s79
      %p93 = scmp.eq.s32.totalorder %s22, 1
      %p94 = por %p92, %p93
      %p96 = scmp.ne.s32.totalorder %s79, %s95
      %p97 = scmp.eq.s32.totalorder %s22, 0
      %p98 = por %p96, %p97
      %s99 = ssub.s32 %s24, %s38
      %p100 = scmp.eq.s32.totalorder %s99, 0
      %s102 = sadd.s32 %s101, 1
      %s103 = scalar_select %p100, %s101, %s102
      %p106 = pneg %p100
      %p107 = scmp.eq.s32.totalorder %s16, 1
      %p108 = por %p106, %p107
      %p109 = scmp.ne.s32.totalorder %s101, %s104
      %p110 = scmp.eq.s32.totalorder %s16, 0
      %p111 = por %p109, %p110
      %p112 = scmp.ne.s32.totalorder %s101, %s104
      %p113 = scmp.eq.s32.totalorder %s21, 1
      %p114 = por %p112, %p113
      %p115 = scmp.ne.s32.totalorder %s104, %s105
      %p116 = scmp.eq.s32.totalorder %s21, 0
      %p117 = por %p115, %p116
      %p118 = scmp.ne.s32.totalorder %s104, %s105
      %p119 = scmp.eq.s32.totalorder %s22, 1
      %p120 = por %p118, %p119
      %p122 = scmp.ne.s32.totalorder %s105, %s121
      %p123 = scmp.eq.s32.totalorder %s22, 0
      %p124 = por %p122, %p123
      %s125 = ssub.s32 %s23, %s42
      %s126 = ssub.s32 %s24, %s38
      %s127 = sor.u32 %s125, %s126
      %p128 = scmp.eq.s32.totalorder %s127, 0
      %s130 = sadd.s32 %s129, 1
      %s131 = scalar_select %p128, %s129, %s130
      %p134 = pneg %p128
      %p135 = scmp.eq.s32.totalorder %s16, 1
      %p136 = por %p134, %p135
      %p137 = scmp.ne.s32.totalorder %s129, %s132
      %p138 = scmp.eq.s32.totalorder %s16, 0
      %p139 = por %p137, %p138
      %p140 = scmp.ne.s32.totalorder %s129, %s132
      %p141 = scmp.eq.s32.totalorder %s21, 1
      %p142 = por %p140, %p141
      %p143 = scmp.ne.s32.totalorder %s132, %s133
      %p144 = scmp.eq.s32.totalorder %s21, 0
      %p145 = por %p143, %p144
      %p146 = scmp.ne.s32.totalorder %s132, %s133
      %p147 = scmp.eq.s32.totalorder %s22, 1
      %p148 = por %p146, %p147
      %p150 = scmp.ne.s32.totalorder %s133, %s149
      %p151 = scmp.eq.s32.totalorder %s22, 0
      %p152 = por %p150, %p151
      %p153 = scmp.le.s32.totalorder 1, %s16
      %p154 = scmp.lt.s32.totalorder %s16, 3
      %p155 = pnand %p153, %p154
      %p156 = pneg %p155
      // Predicated region
      $region9: #{tpu_custom_call.1} parent=5 // pred_check
        _
      $region10: #{tpu_custom_call.1} parent=5 // pred_check_branch
        %158 = sbr.rel (%p155) target = $region12
      $region11: #{tpu_custom_call.1} parent=5 // pred_region
        %s159 = ssub.s32 %s16, 1
        // Predicated region
        $region13: #{tpu_custom_call.1} parent=11 // pred_check
          %p160 = pneg %p63
        $region14: #{tpu_custom_call.1} parent=11 // pred_check_branch
          %162 = sbr.rel (%p160) target = $region16
        $region15: #{tpu_custom_call.1} parent=11 // pred_region
          %s163 = smul.u32 2, %s26
          %s164 = smul.u32 2, %s28
          %s166 = ssub.s32 256, 256
          %167 = vsyncadd [#allocation4], %s166
          %s168 = smul.addr %s163, 2
          %s169 = sadd.s32 %s164, %s168
          %s170 = smul.addr %s169, 64
          %s171 = scalar_lea.hbm %s0, %s170
          %s172 = sshll.u32 [#allocation3], 4
          %s173 = int_to_ptr.vmem [resolvable:$true] %s172
          %178 = dma.hbm_to_vmem [thread:$0]  %s171, 256, %s173, [#allocation4], 128, 128, 8
        $region16: #{tpu_custom_call.1} parent=11 // pred_fallthru
          _
      $region12: #{tpu_custom_call.1} parent=5 // pred_fallthru
        _
      %p179 = scmp.lt.s32.totalorder %s16, 2
      // Predicated region
      $region17: #{tpu_custom_call.1} parent=5 // pred_check
        %p180 = pneg %p179
      $region18: #{tpu_custom_call.1} parent=5 // pred_check_branch
        %182 = sbr.rel (%p180) target = $region20
      $region19: #{tpu_custom_call.1} parent=5 // pred_region
        // Predicated region
        $region21: #{tpu_custom_call.1} parent=19 // pred_check
          %p183 = pneg %p85
        $region22: #{tpu_custom_call.1} parent=19 // pred_check_branch
          %185 = sbr.rel (%p183) target = $region24
        $region23: #{tpu_custom_call.1} parent=19 // pred_region
          %s186 = sand.u32 %s75, 1
          %s187 = scalar_lea.sflag [#allocation7], %s186
          %s188 = sand.u32 %s75, 1
          %s189 = smul.addr %s188, 512
          %s190 = scalar_lea.vmem [#allocation6], %s189
          %s191 = smul.u32 32, %s25
          %s192 = smul.u32 4, %s24
          %s193 = ssub.s32 6, %s192
          %p194 = scmp.lt.s32.totalorder %s193, 4
          %s195 = scalar_select %p194, %s193, 4
          %s196 = smul.u32 2048, %s195
          %s198 = ssub.s32 8192, %s196
          %199 = vsyncadd %s187, %s198
          %p200 = scmp.ne.s32.totalorder 0, %s196
          %s201 = smul.addr %s191, 6
          %s202 = sadd.s32 %s192, %s201
          %s203 = smul.addr %s202, 64
          %s204 = scalar_lea.hbm %s1, %s203
          %s205 = smul.u32 %s195, 4
          %s206 = smul.u32 %s205, 32
          %s207 = sshll.u32 %s190, 4
          %s208 = int_to_ptr.vmem [resolvable:$true] %s207
          %s209 = sshll.u32 %s206, 4
          %213 = dma.hbm_to_vmem [thread:$0]  (%p200), %s204, %s209, %s208, %s187, 384, 256, %s205
        $region24: #{tpu_custom_call.1} parent=19 // pred_fallthru
          _
        // Predicated region
        $region25: #{tpu_custom_call.1} parent=19 // pred_check
          %p214 = pneg %p111
        $region26: #{tpu_custom_call.1} parent=19 // pred_check_branch
          %216 = sbr.rel (%p214) target = $region28
        $region27: #{tpu_custom_call.1} parent=19 // pred_region
          %s217 = smul.u32 4, %s24
          %s218 = ssub.s32 6, %s217
          %p219 = scmp.lt.s32.totalorder %s218, 4
          %s220 = scalar_select %p219, %s218, 4
          %s221 = smul.u32 16, %s220
          %p222 = scmp.lt.s32.totalorder %s217, 5
          %s223 = scalar_select %p222, %s217, 5
          %s224 = scalar_lea.vmem %s2, %s223
          %s225 = smul.u32 4, %s24
          %s226 = ssub.s32 6, %s225
          %p227 = scmp.lt.s32.totalorder %s226, 4
          %s228 = scalar_select %p227, %s226, 4
          %s229 = smul.u32 16, %s228
        $region28: #{tpu_custom_call.1} parent=19 // pred_fallthru
          _
      $region20: #{tpu_custom_call.1} parent=5 // pred_fallthru
        _
      %p230 = scmp.le.s32.totalorder 1, %s16
      %p231 = scmp.lt.s32.totalorder %s16, 3
      %p232 = pnand %p230, %p231
      %p233 = pneg %p232
      // Predicated region
      $region29: #{tpu_custom_call.1} parent=5 // pred_check
        _
      $region30: #{tpu_custom_call.1} parent=5 // pred_check_branch
        %235 = sbr.rel (%p232) target = $region32
      $region31: #{tpu_custom_call.1} parent=5 // pred_region
        %s236 = ssub.s32 %s16, 1
        // Predicated region
        $region33: #{tpu_custom_call.1} parent=31 // pred_check
          %p237 = pneg %p63
        $region34: #{tpu_custom_call.1} parent=31 // pred_check_branch
          %239 = sbr.rel (%p237) target = $region36
        $region35: #{tpu_custom_call.1} parent=31 // pred_region
          %240 = dma.done [#allocation4], 256
        $region36: #{tpu_custom_call.1} parent=31 // pred_fallthru
          _
        %s241 = sand.u32 %s78, 1
        %s242 = scalar_lea.sflag [#allocation7], %s241
        %s243 = sand.u32 %s78, 1
        %s244 = smul.addr %s243, 512
        %s245 = scalar_lea.vmem [#allocation6], %s244
        // Predicated region
        $region37: #{tpu_custom_call.1} parent=31 // pred_check
          %p246 = pneg %p91
        $region38: #{tpu_custom_call.1} parent=31 // pred_check_branch
          %248 = sbr.rel (%p246) target = $region40
        $region39: #{tpu_custom_call.1} parent=31 // pred_region
          %249 = dma.done %s242, 8192
        $region40: #{tpu_custom_call.1} parent=31 // pred_fallthru
          _
        %p250 = pneg %p63
        %p251 = pneg %p60
        %s252 = sand.u32 %s78, 1
        %s253 = scalar_lea.sflag [#allocation7], %s252
        %s254 = sand.u32 %s78, 1
        %s255 = smul.addr %s254, 512
        %s256 = scalar_lea.vmem [#allocation6], %s255
        %p257 = pneg %p91
        %p258 = pneg %p88
        %s259 = smul.u32 4, %s27
        %s260 = ssub.s32 6, %s259
        %p261 = scmp.lt.s32.totalorder %s260, 4
        %s262 = scalar_select %p261, %s260, 4
        %s263 = smul.u32 16, %s262
        %p264 = scmp.lt.s32.totalorder %s259, 5
        %s265 = scalar_select %p264, %s259, 5
        %s266 = scalar_lea.vmem %s2, %s265
        %p267 = pneg %p117
        %p268 = pneg %p114
        %p269 = pneg %p145
        %p270 = pneg %p142
        %s271 = sand.u32 %s132, 1
        %s272 = scalar_lea.sflag [#allocation5], %s271
        %s273 = sand.u32 %s132, 1
        %s274 = smul.addr %s273, 32
        %s275 = scalar_lea.vmem [#allocation8], %s274
        %s276 = smul.u32 2, %s26
        %s277 = smul.u32 2, %s28
        %s278 = smul.u32 32, %s28
        %s279 = smul.u32 4, %s27
        %s280 = ssub.s32 6, %s279
        %p281 = scmp.lt.s32.totalorder %s280, 4
        %s282 = scalar_select %p281, %s280, 4
        %s283 = smul.u32 2048, %s282
        %s284 = smul.u32 4, %s27
        %s285 = ssub.s32 6, %s284
        %p286 = scmp.lt.s32.totalorder %s285, 4
        %s287 = scalar_select %p286, %s285, 4
        %s288 = smul.u32 16, %s287
        %p289 = scmp.lt.s32.totalorder %s284, 5
        %s290 = scalar_select %p289, %s284, 5
        %s291 = scalar_lea.vmem %s2, %s290
        %s292 = smul.u32 4, %s27
        %s293 = ssub.s32 6, %s292
        %p294 = scmp.lt.s32.totalorder %s293, 4
        %s295 = scalar_select %p294, %s293, 4
        %s296 = smul.u32 16, %s295
        %s297 = smul.u32 2, %s26
        %s298 = smul.u32 4, %s27
        %s299 = ssub.s32 6, %s298
        %p300 = scmp.lt.s32.totalorder %s299, 4
        %s301 = scalar_select %p300, %s299, 4
        %s302 = smul.u32 128, %s301
        %p303 = scmp.eq.s32.totalorder %s28, 0
        // Predicated region
        $region41: #{tpu_custom_call.1} parent=31 // pred_check
          %p304 = pneg %p303
        $region42: #{tpu_custom_call.1} parent=31 // pred_check_branch
          %306 = sbr.rel (%p304) target = $region44
        $region43: #{tpu_custom_call.1} parent=31 // pred_region
          %307 = vst [vmem:[#allocation2] sm:$0xff] 0.0
          %308 = vst [vmem:[#allocation2 + $0x8] sm:$0xff] 0.0
          %309 = vst [vmem:[#allocation2 + $0x10] sm:$0xff] 0.0
          %310 = vst [vmem:[#allocation2 + $0x18] sm:$0xff] 0.0
          %311 = vst [vmem:[#allocation2 + $0x20] sm:$0xff] 0.0
          %312 = vst [vmem:[#allocation2 + $0x28] sm:$0xff] 0.0
          %313 = vst [vmem:[#allocation2 + $0x30] sm:$0xff] 0.0
          %314 = vst [vmem:[#allocation2 + $0x38] sm:$0xff] 0.0
        $region44: #{tpu_custom_call.1} parent=31 // pred_fallthru
          _
        %v315 = vld [vmem:[#allocation2] sm:$0xff]
        %v316 = vld [vmem:[#allocation2 + $0x8] sm:$0xff]
        %v317 = vld [vmem:[#allocation2 + $0x10] sm:$0xff]
        %v318 = vld [vmem:[#allocation2 + $0x18] sm:$0xff]
        %v319 = vld [vmem:[#allocation2 + $0x20] sm:$0xff]
        %v320 = vld [vmem:[#allocation2 + $0x28] sm:$0xff]
        %v321 = vld [vmem:[#allocation2 + $0x30] sm:$0xff]
        %v322 = vld [vmem:[#allocation2 + $0x38] sm:$0xff]
        %v323 = vld [vmem:[#allocation3] sm:$0xff]
        %v324 = vld [vmem:[#allocation3 + $0x8] sm:$0xff]
        %v325 = vld [vmem:[%s245] sm:$0xff]
        %v326 = vld [vmem:[%s245 + $0x8] sm:$0xff]
        %v327 = vld [vmem:[%s245 + $0x10] sm:$0xff]
        %v328 = vld [vmem:[%s245 + $0x18] sm:$0xff]
        %v329 = vld [vmem:[%s245 + $0x20] sm:$0xff]
        %v330 = vld [vmem:[%s245 + $0x28] sm:$0xff]
        %v331 = vld [vmem:[%s245 + $0x30] sm:$0xff]
        %v332 = vld [vmem:[%s245 + $0x38] sm:$0xff]
        %v333 = vld [vmem:[%s245 + $0x40] sm:$0xff]
        %v334 = vld [vmem:[%s245 + $0x48] sm:$0xff]
        %v335 = vld [vmem:[%s245 + $0x50] sm:$0xff]
        %v336 = vld [vmem:[%s245 + $0x58] sm:$0xff]
        %v337 = vld [vmem:[%s245 + $0x60] sm:$0xff]
        %v338 = vld [vmem:[%s245 + $0x68] sm:$0xff]
        %v339 = vld [vmem:[%s245 + $0x70] sm:$0xff]
        %v340 = vld [vmem:[%s245 + $0x78] sm:$0xff]
        %v341 = vld [vmem:[%s245 + $0x80] sm:$0xff]
        %v342 = vld [vmem:[%s245 + $0x88] sm:$0xff]
        %v343 = vld [vmem:[%s245 + $0x90] sm:$0xff]
        %v344 = vld [vmem:[%s245 + $0x98] sm:$0xff]
        %v345 = vld [vmem:[%s245 + $0xa0] sm:$0xff]
        %v346 = vld [vmem:[%s245 + $0xa8] sm:$0xff]
        %v347 = vld [vmem:[%s245 + $0xb0] sm:$0xff]
        %v348 = vld [vmem:[%s245 + $0xb8] sm:$0xff]
        %v349 = vld [vmem:[%s245 + $0xc0] sm:$0xff]
        %v350 = vld [vmem:[%s245 + $0xc8] sm:$0xff]
        %v351 = vld [vmem:[%s245 + $0xd0] sm:$0xff]
        %v352 = vld [vmem:[%s245 + $0xd8] sm:$0xff]
        %v353 = vld [vmem:[%s245 + $0xe0] sm:$0xff]
        %v354 = vld [vmem:[%s245 + $0xe8] sm:$0xff]
        %v355 = vld [vmem:[%s245 + $0xf0] sm:$0xff]
        %v356 = vld [vmem:[%s245 + $0xf8] sm:$0xff]
        %v357 = vld [vmem:[%s245 + $0x100] sm:$0xff]
        %v358 = vld [vmem:[%s245 + $0x108] sm:$0xff]
        %v359 = vld [vmem:[%s245 + $0x110] sm:$0xff]
        %v360 = vld [vmem:[%s245 + $0x118] sm:$0xff]
        %v361 = vld [vmem:[%s245 + $0x120] sm:$0xff]
        %v362 = vld [vmem:[%s245 + $0x128] sm:$0xff]
        %v363 = vld [vmem:[%s245 + $0x130] sm:$0xff]
        %v364 = vld [vmem:[%s245 + $0x138] sm:$0xff]
        %v365 = vld [vmem:[%s245 + $0x140] sm:$0xff]
        %v366 = vld [vmem:[%s245 + $0x148] sm:$0xff]
        %v367 = vld [vmem:[%s245 + $0x150] sm:$0xff]
        %v368 = vld [vmem:[%s245 + $0x158] sm:$0xff]
        %v369 = vld [vmem:[%s245 + $0x160] sm:$0xff]
        %v370 = vld [vmem:[%s245 + $0x168] sm:$0xff]
        %v371 = vld [vmem:[%s245 + $0x170] sm:$0xff]
        %v372 = vld [vmem:[%s245 + $0x178] sm:$0xff]
        %v373 = vld [vmem:[%s245 + $0x180] sm:$0xff]
        %v374 = vld [vmem:[%s245 + $0x188] sm:$0xff]
        %v375 = vld [vmem:[%s245 + $0x190] sm:$0xff]
        %v376 = vld [vmem:[%s245 + $0x198] sm:$0xff]
        %v377 = vld [vmem:[%s245 + $0x1a0] sm:$0xff]
        %v378 = vld [vmem:[%s245 + $0x1a8] sm:$0xff]
        %v379 = vld [vmem:[%s245 + $0x1b0] sm:$0xff]
        %v380 = vld [vmem:[%s245 + $0x1b8] sm:$0xff]
        %v381 = vld [vmem:[%s245 + $0x1c0] sm:$0xff]
        %v382 = vld [vmem:[%s245 + $0x1c8] sm:$0xff]
        %v383 = vld [vmem:[%s245 + $0x1d0] sm:$0xff]
        %v384 = vld [vmem:[%s245 + $0x1d8] sm:$0xff]
        %v385 = vld [vmem:[%s245 + $0x1e0] sm:$0xff]
        %v386 = vld [vmem:[%s245 + $0x1e8] sm:$0xff]
        %v387 = vld [vmem:[%s245 + $0x1f0] sm:$0xff]
        %v388 = vld [vmem:[%s245 + $0x1f8] sm:$0xff]
        %v391 = vunpack.c.l.b16 %v323
        %v392 = vunpack.c.h.b16 %v323
        %v393 = vunpack.c.l.b16 %v324
        %v394 = vunpack.c.h.b16 %v324
        %v395 = vpack.c.b16 %v393, %v391
        %v396 = vpack.c.b16 %v394, %v392
        %v463 = vunpack.c.l.b16 %v325
        %v464 = vunpack.c.h.b16 %v325
        %v465 = vunpack.c.l.b16 %v326
        %v466 = vunpack.c.h.b16 %v326
        %v467 = vunpack.c.l.b16 %v327
        %v468 = vunpack.c.h.b16 %v327
        %v469 = vunpack.c.l.b16 %v328
        %v470 = vunpack.c.h.b16 %v328
        %v471 = vunpack.c.l.b16 %v329
        %v472 = vunpack.c.h.b16 %v329
        %v473 = vunpack.c.l.b16 %v330
        %v474 = vunpack.c.h.b16 %v330
        %v475 = vunpack.c.l.b16 %v331
        %v476 = vunpack.c.h.b16 %v331
        %v477 = vunpack.c.l.b16 %v332
        %v478 = vunpack.c.h.b16 %v332
        %v479 = vunpack.c.l.b16 %v333
        %v480 = vunpack.c.h.b16 %v333
        %v481 = vunpack.c.l.b16 %v334
        %v482 = vunpack.c.h.b16 %v334
        %v483 = vunpack.c.l.b16 %v335
        %v484 = vunpack.c.h.b16 %v335
        %v485 = vunpack.c.l.b16 %v336
        %v486 = vunpack.c.h.b16 %v336
        %v487 = vunpack.c.l.b16 %v337
        %v488 = vunpack.c.h.b16 %v337
        %v489 = vunpack.c.l.b16 %v338
        %v490 = vunpack.c.h.b16 %v338
        %v491 = vunpack.c.l.b16 %v339
        %v492 = vunpack.c.h.b16 %v339
        %v493 = vunpack.c.l.b16 %v340
        %v494 = vunpack.c.h.b16 %v340
        %v495 = vunpack.c.l.b16 %v341
        %v496 = vunpack.c.h.b16 %v341
        %v497 = vunpack.c.l.b16 %v342
        %v498 = vunpack.c.h.b16 %v342
        %v499 = vunpack.c.l.b16 %v343
        %v500 = vunpack.c.h.b16 %v343
        %v501 = vunpack.c.l.b16 %v344
        %v502 = vunpack.c.h.b16 %v344
        %v503 = vunpack.c.l.b16 %v345
        %v504 = vunpack.c.h.b16 %v345
        %v505 = vunpack.c.l.b16 %v346
        %v506 = vunpack.c.h.b16 %v346
        %v507 = vunpack.c.l.b16 %v347
        %v508 = vunpack.c.h.b16 %v347
        %v509 = vunpack.c.l.b16 %v348
        %v510 = vunpack.c.h.b16 %v348
        %v511 = vunpack.c.l.b16 %v349
        %v512 = vunpack.c.h.b16 %v349
        %v513 = vunpack.c.l.b16 %v350
        %v514 = vunpack.c.h.b16 %v350
        %v515 = vunpack.c.l.b16 %v351
        %v516 = vunpack.c.h.b16 %v351
        %v517 = vunpack.c.l.b16 %v352
        %v518 = vunpack.c.h.b16 %v352
        %v519 = vunpack.c.l.b16 %v353
        %v520 = vunpack.c.h.b16 %v353
        %v521 = vunpack.c.l.b16 %v354
        %v522 = vunpack.c.h.b16 %v354
        %v523 = vunpack.c.l.b16 %v355
        %v524 = vunpack.c.h.b16 %v355
        %v525 = vunpack.c.l.b16 %v356
        %v526 = vunpack.c.h.b16 %v356
        %v527 = vunpack.c.l.b16 %v357
        %v528 = vunpack.c.h.b16 %v357
        %v529 = vunpack.c.l.b16 %v358
        %v530 = vunpack.c.h.b16 %v358
        %v531 = vunpack.c.l.b16 %v359
        %v532 = vunpack.c.h.b16 %v359
        %v533 = vunpack.c.l.b16 %v360
        %v534 = vunpack.c.h.b16 %v360
        %v535 = vunpack.c.l.b16 %v361
        %v536 = vunpack.c.h.b16 %v361
        %v537 = vunpack.c.l.b16 %v362
        %v538 = vunpack.c.h.b16 %v362
        %v539 = vunpack.c.l.b16 %v363
        %v540 = vunpack.c.h.b16 %v363
        %v541 = vunpack.c.l.b16 %v364
        %v542 = vunpack.c.h.b16 %v364
        %v543 = vunpack.c.l.b16 %v365
        %v544 = vunpack.c.h.b16 %v365
        %v545 = vunpack.c.l.b16 %v366
        %v546 = vunpack.c.h.b16 %v366
        %v547 = vunpack.c.l.b16 %v367
        %v548 = vunpack.c.h.b16 %v367
        %v549 = vunpack.c.l.b16 %v368
        %v550 = vunpack.c.h.b16 %v368
        %v551 = vunpack.c.l.b16 %v369
        %v552 = vunpack.c.h.b16 %v369
        %v553 = vunpack.c.l.b16 %v370
        %v554 = vunpack.c.h.b16 %v370
        %v555 = vunpack.c.l.b16 %v371
        %v556 = vunpack.c.h.b16 %v371
        %v557 = vunpack.c.l.b16 %v372
        %v558 = vunpack.c.h.b16 %v372
        %v559 = vunpack.c.l.b16 %v373
        %v560 = vunpack.c.h.b16 %v373
        %v561 = vunpack.c.l.b16 %v374
        %v562 = vunpack.c.h.b16 %v374
        %v563 = vunpack.c.l.b16 %v375
        %v564 = vunpack.c.h.b16 %v375
        %v565 = vunpack.c.l.b16 %v376
        %v566 = vunpack.c.h.b16 %v376
        %v567 = vunpack.c.l.b16 %v377
        %v568 = vunpack.c.h.b16 %v377
        %v569 = vunpack.c.l.b16 %v378
        %v570 = vunpack.c.h.b16 %v378
        %v571 = vunpack.c.l.b16 %v379
        %v572 = vunpack.c.h.b16 %v379
        %v573 = vunpack.c.l.b16 %v380
        %v574 = vunpack.c.h.b16 %v380
        %v575 = vunpack.c.l.b16 %v381
        %v576 = vunpack.c.h.b16 %v381
        %v577 = vunpack.c.l.b16 %v382
        %v578 = vunpack.c.h.b16 %v382
        %v579 = vunpack.c.l.b16 %v383
        %v580 = vunpack.c.h.b16 %v383
        %v581 = vunpack.c.l.b16 %v384
        %v582 = vunpack.c.h.b16 %v384
        %v583 = vunpack.c.l.b16 %v385
        %v584 = vunpack.c.h.b16 %v385
        %v585 = vunpack.c.l.b16 %v386
        %v586 = vunpack.c.h.b16 %v386
        %v587 = vunpack.c.l.b16 %v387
        %v588 = vunpack.c.h.b16 %v387
        %v589 = vunpack.c.l.b16 %v388
        %v590 = vunpack.c.h.b16 %v388
        %v591 = vpack.c.b16 %v467, %v463
        %v592 = vpack.c.b16 %v468, %v464
        %v593 = vpack.c.b16 %v469, %v465
        %v594 = vpack.c.b16 %v470, %v466
        %v595 = vpack.c.b16 %v475, %v471
        %v596 = vpack.c.b16 %v476, %v472
        %v597 = vpack.c.b16 %v477, %v473
        %v598 = vpack.c.b16 %v478, %v474
        %v599 = vpack.c.b16 %v483, %v479
        %v600 = vpack.c.b16 %v484, %v480
        %v601 = vpack.c.b16 %v485, %v481
        %v602 = vpack.c.b16 %v486, %v482
        %v603 = vpack.c.b16 %v491, %v487
        %v604 = vpack.c.b16 %v492, %v488
        %v605 = vpack.c.b16 %v493, %v489
        %v606 = vpack.c.b16 %v494, %v490
        %v607 = vpack.c.b16 %v499, %v495
        %v608 = vpack.c.b16 %v500, %v496
        %v609 = vpack.c.b16 %v501, %v497
        %v610 = vpack.c.b16 %v502, %v498
        %v611 = vpack.c.b16 %v507, %v503
        %v612 = vpack.c.b16 %v508, %v504
        %v613 = vpack.c.b16 %v509, %v505
        %v614 = vpack.c.b16 %v510, %v506
        %v615 = vpack.c.b16 %v515, %v511
        %v616 = vpack.c.b16 %v516, %v512
        %v617 = vpack.c.b16 %v517, %v513
        %v618 = vpack.c.b16 %v518, %v514
        %v619 = vpack.c.b16 %v523, %v519
        %v620 = vpack.c.b16 %v524, %v520
        %v621 = vpack.c.b16 %v525, %v521
        %v622 = vpack.c.b16 %v526, %v522
        %v623 = vpack.c.b16 %v531, %v527
        %v624 = vpack.c.b16 %v532, %v528
        %v625 = vpack.c.b16 %v533, %v529
        %v626 = vpack.c.b16 %v534, %v530
        %v627 = vpack.c.b16 %v539, %v535
        %v628 = vpack.c.b16 %v540, %v536
        %v629 = vpack.c.b16 %v541, %v537
        %v630 = vpack.c.b16 %v542, %v538
        %v631 = vpack.c.b16 %v547, %v543
        %v632 = vpack.c.b16 %v548, %v544
        %v633 = vpack.c.b16 %v549, %v545
        %v634 = vpack.c.b16 %v550, %v546
        %v635 = vpack.c.b16 %v555, %v551
        %v636 = vpack.c.b16 %v556, %v552
        %v637 = vpack.c.b16 %v557, %v553
        %v638 = vpack.c.b16 %v558, %v554
        %v639 = vpack.c.b16 %v563, %v559
        %v640 = vpack.c.b16 %v564, %v560
        %v641 = vpack.c.b16 %v565, %v561
        %v642 = vpack.c.b16 %v566, %v562
        %v643 = vpack.c.b16 %v571, %v567
        %v644 = vpack.c.b16 %v572, %v568
        %v645 = vpack.c.b16 %v573, %v569
        %v646 = vpack.c.b16 %v574, %v570
        %v647 = vpack.c.b16 %v579, %v575
        %v648 = vpack.c.b16 %v580, %v576
        %v649 = vpack.c.b16 %v581, %v577
        %v650 = vpack.c.b16 %v582, %v578
        %v651 = vpack.c.b16 %v587, %v583
        %v652 = vpack.c.b16 %v588, %v584
        %v653 = vpack.c.b16 %v589, %v585
        %v654 = vpack.c.b16 %v590, %v586
        %719 = vmatprep.subr.bf16.mxu0 %v592
        %720 = vmatpush1.bf16.msra.mxu0 %v591
        %721 = vmatprep.subr.bf16.mxu0 %v596
        %722 = vmatpush1.bf16.msra.mxu0 %v595
        %723 = vmatprep.subr.bf16.mxu0 %v600
        %724 = vmatpush1.bf16.msra.mxu0 %v599
        %725 = vmatprep.subr.bf16.mxu0 %v604
        %726 = vmatpush1.bf16.msra.mxu0 %v603
        %727 = vmatprep.subr.bf16.mxu0 %v608
        %728 = vmatpush1.bf16.msra.mxu0 %v607
        %729 = vmatprep.subr.bf16.mxu0 %v612
        %730 = vmatpush1.bf16.msra.mxu0 %v611
        %731 = vmatprep.subr.bf16.mxu0 %v616
        %732 = vmatpush1.bf16.msra.mxu0 %v615
        %733 = vmatprep.subr.bf16.mxu0 %v620
        %734 = vmatpush1.bf16.msra.mxu0 %v619
        %735 = vmatprep.subr.bf16.mxu0 %v624
        %736 = vmatpush1.bf16.msra.mxu0 %v623
        %737 = vmatprep.subr.bf16.mxu0 %v628
        %738 = vmatpush1.bf16.msra.mxu0 %v627
        %739 = vmatprep.subr.bf16.mxu0 %v632
        %740 = vmatpush1.bf16.msra.mxu0 %v631
        %741 = vmatprep.subr.bf16.mxu0 %v636
        %742 = vmatpush1.bf16.msra.mxu0 %v635
        %743 = vmatprep.subr.bf16.mxu0 %v640
        %744 = vmatpush1.bf16.msra.mxu0 %v639
        %745 = vmatprep.subr.bf16.mxu0 %v644
        %746 = vmatpush1.bf16.msra.mxu0 %v643
        %747 = vmatprep.subr.bf16.mxu0 %v648
        %748 = vmatpush1.bf16.msra.mxu0 %v647
        %749 = vmatprep.subr.bf16.mxu0 %v652
        %750 = vmatpush1.bf16.msra.mxu0 %v651
        %751 = vmatprep.mubr.bf16.mxu0 %v396
        %752 = vmatmul.mubr.bf16.gmra.mrb[0].mxu0 %v395
        %v753 = vpop.f32.mrb[0].mxu0
        %v754 = vadd.f32 0.0, %v753
        %v755 = vpop.f32.mrb[0].mxu0
        %v756 = vadd.f32 0.0, %v755
        %v757 = vpop.f32.mrb[0].mxu0
        %v758 = vadd.f32 0.0, %v757
        %v759 = vpop.f32.mrb[0].mxu0
        %v760 = vadd.f32 0.0, %v759
        %761 = vdwg.mxu0
        %762 = vmatprep.subr.bf16.mxu0 %v594
        %763 = vmatpush1.bf16.msra.mxu0 %v593
        %764 = vmatprep.subr.bf16.mxu0 %v598
        %765 = vmatpush1.bf16.msra.mxu0 %v597
        %766 = vmatprep.subr.bf16.mxu0 %v602
        %767 = vmatpush1.bf16.msra.mxu0 %v601
        %768 = vmatprep.subr.bf16.mxu0 %v606
        %769 = vmatpush1.bf16.msra.mxu0 %v605
        %770 = vmatprep.subr.bf16.mxu0 %v610
        %771 = vmatpush1.bf16.msra.mxu0 %v609
        %772 = vmatprep.subr.bf16.mxu0 %v614
        %773 = vmatpush1.bf16.msra.mxu0 %v613
        %774 = vmatprep.subr.bf16.mxu0 %v618
        %775 = vmatpush1.bf16.msra.mxu0 %v617
        %776 = vmatprep.subr.bf16.mxu0 %v622
        %777 = vmatpush1.bf16.msra.mxu0 %v621
        %778 = vmatprep.subr.bf16.mxu0 %v626
        %779 = vmatpush1.bf16.msra.mxu0 %v625
        %780 = vmatprep.subr.bf16.mxu0 %v630
        %781 = vmatpush1.bf16.msra.mxu0 %v629
        %782 = vmatprep.subr.bf16.mxu0 %v634
        %783 = vmatpush1.bf16.msra.mxu0 %v633
        %784 = vmatprep.subr.bf16.mxu0 %v638
        %785 = vmatpush1.bf16.msra.mxu0 %v637
        %786 = vmatprep.subr.bf16.mxu0 %v642
        %787 = vmatpush1.bf16.msra.mxu0 %v641
        %788 = vmatprep.subr.bf16.mxu0 %v646
        %789 = vmatpush1.bf16.msra.mxu0 %v645
        %790 = vmatprep.subr.bf16.mxu0 %v650
        %791 = vmatpush1.bf16.msra.mxu0 %v649
        %792 = vmatprep.subr.bf16.mxu0 %v654
        %793 = vmatpush1.bf16.msra.mxu0 %v653
        %794 = vmatprep.mubr.bf16.mxu0 %v396
        %795 = vmatmul.mubr.bf16.gmra.mrb[0].mxu0 %v395
        %v796 = vpop.f32.mrb[0].mxu0
        %v797 = vadd.f32 0.0, %v796
        %v798 = vpop.f32.mrb[0].mxu0
        %v799 = vadd.f32 0.0, %v798
        %v800 = vpop.f32.mrb[0].mxu0
        %v801 = vadd.f32 0.0, %v800
        %v802 = vpop.f32.mrb[0].mxu0
        %v803 = vadd.f32 0.0, %v802
        %804 = vdwg.mxu0
        %v805 = vadd.f32 %v315, %v754
        %v806 = vadd.f32 %v316, %v756
        %v807 = vadd.f32 %v317, %v797
        %v808 = vadd.f32 %v318, %v799
        %v809 = vadd.f32 %v319, %v758
        %v810 = vadd.f32 %v320, %v760
        %v811 = vadd.f32 %v321, %v801
        %v812 = vadd.f32 %v322, %v803
        %813 = vst [vmem:[#allocation2] sm:$0xff] %v805
        %814 = vst [vmem:[#allocation2 + $0x8] sm:$0xff] %v806
        %815 = vst [vmem:[#allocation2 + $0x10] sm:$0xff] %v807
        %816 = vst [vmem:[#allocation2 + $0x18] sm:$0xff] %v808
        %817 = vst [vmem:[#allocation2 + $0x20] sm:$0xff] %v809
        %818 = vst [vmem:[#allocation2 + $0x28] sm:$0xff] %v810
        %819 = vst [vmem:[#allocation2 + $0x30] sm:$0xff] %v811
        %820 = vst [vmem:[#allocation2 + $0x38] sm:$0xff] %v812
        // Predicated region
        $region45: #{tpu_custom_call.1} parent=31 // pred_check
          %p821 = pneg %p303
        $region46: #{tpu_custom_call.1} parent=31 // pred_check_branch
          %823 = sbr.rel (%p821) target = $region48
        $region47: #{tpu_custom_call.1} parent=31 // pred_region
          %v824 = vld [vmem:[#allocation2] sm:$0xff]
          %v825 = vld [vmem:[#allocation2 + $0x8] sm:$0xff]
          %v826 = vld [vmem:[#allocation2 + $0x10] sm:$0xff]
          %v827 = vld [vmem:[#allocation2 + $0x18] sm:$0xff]
          %v828 = vld [vmem:[#allocation2 + $0x20] sm:$0xff]
          %v829 = vld [vmem:[#allocation2 + $0x28] sm:$0xff]
          %v830 = vld [vmem:[#allocation2 + $0x30] sm:$0xff]
          %v831 = vld [vmem:[#allocation2 + $0x38] sm:$0xff]
          %v832 = vld [vmem:[%s291] sm:$0xf]
          %v834 = vlaneseq
          %v835 = vshrl.u32 %v834, 7
          %v836 = vsub.s32 0, %v835
          %v837 = vrot.slane %v832, %v836
          %v838 = vlaneseq
          %v839 = vshrl.u32 %v838, 7
          %v840 = vsub.s32 1, %v839
          %v841 = vrot.slane %v832, %v840
          %v842 = vlaneseq
          %v843 = vshrl.u32 %v842, 7
          %v844 = vsub.s32 2, %v843
          %v845 = vrot.slane %v832, %v844
          %v846 = vlaneseq
          %v847 = vshrl.u32 %v846, 7
          %v848 = vsub.s32 3, %v847
          %v849 = vrot.slane %v832, %v848
          %v854 = vadd.f32 %v824, %v837
          %v855 = vadd.f32 %v825, %v841
          %v856 = vadd.f32 %v826, %v845
          %v857 = vadd.f32 %v827, %v849
          %v858 = vadd.f32 %v828, %v837
          %v859 = vadd.f32 %v829, %v841
          %v860 = vadd.f32 %v830, %v845
          %v861 = vadd.f32 %v831, %v849
          %v862 = vpack.c.bf16 %v858, %v854
          %v863 = vpack.c.bf16 %v859, %v855
          %v864 = vpack.c.bf16 %v860, %v856
          %v865 = vpack.c.bf16 %v861, %v857
          %v870 = vunpack.c.l.b16 %v862
          %v871 = vunpack.c.l.b16 %v863
          %v872 = vunpack.c.l.b16 %v864
          %v873 = vunpack.c.l.b16 %v865
          %v874 = vunpack.c.h.b16 %v862
          %v875 = vunpack.c.h.b16 %v863
          %v876 = vunpack.c.h.b16 %v864
          %v877 = vunpack.c.h.b16 %v865
          %v878 = vpack.c.b16 %v871, %v870
          %v879 = vpack.c.b16 %v873, %v872
          %v880 = vpack.c.b16 %v875, %v874
          %v881 = vpack.c.b16 %v877, %v876
          %886 = vst [vmem:[%s275] sm:$0xff] %v878
          %887 = vst [vmem:[%s275 + $0x8] sm:$0xff] %v879
          %888 = vst [vmem:[%s275 + $0x10] sm:$0xff] %v880
          %889 = vst [vmem:[%s275 + $0x18] sm:$0xff] %v881
        $region48: #{tpu_custom_call.1} parent=31 // pred_fallthru
          _
        %s890 = sand.u32 %s132, 1
        %s891 = scalar_lea.sflag [#allocation5], %s890
        %s892 = sand.u32 %s132, 1
        %s893 = smul.addr %s892, 32
        %s894 = scalar_lea.vmem [#allocation8], %s893
        // Predicated region
        $region49: #{tpu_custom_call.1} parent=31 // pred_check
          %p895 = pneg %p142
        $region50: #{tpu_custom_call.1} parent=31 // pred_check_branch
          %897 = sbr.rel (%p895) target = $region52
        $region51: #{tpu_custom_call.1} parent=31 // pred_region
          %s898 = smul.u32 2, %s26
          %s899 = smul.u32 4, %s27
          %s900 = ssub.s32 6, %s899
          %p901 = scmp.lt.s32.totalorder %s900, 4
          %s902 = scalar_select %p901, %s900, 4
          %s903 = smul.u32 128, %s902
          %s905 = ssub.s32 512, %s903
          %906 = vsyncadd %s891, %s905
          %p907 = scmp.ne.s32.totalorder 0, %s903
          %s908 = smul.addr %s898, 6
          %s909 = sadd.s32 %s899, %s908
          %s910 = smul.addr %s909, 64
          %s911 = scalar_lea.hbm %s3, %s910
          %s912 = smul.u32 %s902, 4
          %s913 = smul.u32 %s912, 2
          %s914 = sshll.u32 %s894, 4
          %s915 = int_to_ptr.vmem [resolvable:$true] %s914
          %s916 = sshll.u32 %s913, 4
          %920 = dma.vmem_to_hbm [thread:$0]  (%p907), %s915, %s916, %s911, %s891, 256, 384, %s912
        $region52: #{tpu_custom_call.1} parent=31 // pred_fallthru
          _
      $region32: #{tpu_custom_call.1} parent=5 // pred_fallthru
        _
      %p921 = scmp.le.s32.totalorder 2, %s16
      // Predicated region
      $region53: #{tpu_custom_call.1} parent=5 // pred_check
        %p922 = pneg %p921
      $region54: #{tpu_custom_call.1} parent=5 // pred_check_branch
        %924 = sbr.rel (%p922) target = $region56
      $region55: #{tpu_custom_call.1} parent=5 // pred_region
        %s925 = ssub.s32 %s16, 2
        // Predicated region
        $region57: #{tpu_custom_call.1} parent=55 // pred_check
          %p926 = pneg %p148
        $region58: #{tpu_custom_call.1} parent=55 // pred_check_branch
          %928 = sbr.rel (%p926) target = $region60
        $region59: #{tpu_custom_call.1} parent=55 // pred_region
          %s929 = sand.u32 %s133, 1
          %s930 = scalar_lea.sflag [#allocation5], %s929
          %s931 = sand.u32 %s133, 1
          %s932 = smul.addr %s931, 32
          %s933 = scalar_lea.vmem [#allocation8], %s932
          %934 = dma.done %s930, 512
        $region60: #{tpu_custom_call.1} parent=55 // pred_fallthru
          _
      $region56: #{tpu_custom_call.1} parent=5 // pred_fallthru
        _
    $region6: #{tpu_custom_call.1} parent=1 // loop_footer
      %s20 = sadd.s32 1, %s16
    $region7: #{tpu_custom_call.1} parent=1 // loop_footer_branch
      %15 = sbr.rel target = $region3
    $region8: #{tpu_custom_call.1} parent=1 // loop_exit
      _
    %935 = vsyncpa [#allocation4], 1
    %s936 = scalar_lea.sflag [#allocation4], 1
    %937 = vsyncpa %s936, 1
    %938 = vsyncpa [#allocation7], 1
    %s939 = scalar_lea.sflag [#allocation7], 1
    %940 = vsyncpa %s939, 1
    %941 = vsyncpa [#allocation5], 1
    %s942 = scalar_lea.sflag [#allocation5], 1
    %943 = vsyncpa %s942, 1

</llo_original>
